<compile_context>
chip_gen: v6e
topology: v6e:2x2x1
jax: 0.10.0
libtpu: 0.0.40
codegen_flags: <defaults>
</compile_context>

<pallas_src>
import jax
import jax.numpy as jnp
from jax import lax
from jax.experimental import pallas as pl
from jax.experimental.pallas import tpu as pltpu

LN_EPS = 1e-5  # torch.nn.LayerNorm default


def _make_kernel(S, tile_s):
    tail = S % tile_s  # compile-time: only emit tail masking if needed

    def kernel(x_ref, w_ref, b_ref, o_ref, acc_ref):
        s = pl.program_id(1)
        ns = pl.num_programs(1)

        # ---- init running-max accumulator ----
        @pl.when(s == 0)
        def _init():
            acc_ref[...] = jnp.full(acc_ref.shape, -jnp.inf, dtype=acc_ref.dtype)

        def _fold(x):
            tile_max = jnp.max(x, axis=-1).astype(jnp.float32)       # (Bp, C)
            acc_ref[...] = jnp.maximum(acc_ref[...], tile_max)

        if tail:
            # Hot path: every step but the last is a pure load + max.
            @pl.when(s < ns - 1)
            def _body():
                _fold(x_ref[...])

            # Only the final (partial) block pays for iota/compare/select.
            @pl.when(s == ns - 1)
            def _tail_body():
                x = x_ref[...]                                       # (Bp, C, St)
                col = s * tile_s + lax.broadcasted_iota(jnp.int32, x.shape, 2)
                x = jnp.where(col < S, x, jnp.full_like(x, -jnp.inf))
                _fold(x)
        else:
            _fold(x_ref[...])

        # ---- fused LayerNorm + two-head Linear, only on the last step ----
        @pl.when(s == ns - 1)
        def _finish():
            pooled = acc_ref[...]                                        # (Bp, C) f32
            mu = jnp.mean(pooled, axis=-1, keepdims=True)                # (Bp, 1)
            var = jnp.mean((pooled - mu) ** 2, axis=-1, keepdims=True)   # (Bp, 1)
            xn = (pooled - mu) * lax.rsqrt(var + LN_EPS)                 # (Bp, C)
            # gamma/beta are folded into w/b in the wrapper -> single MXU matmul.
            out = jnp.dot(xn, w_ref[...], preferred_element_type=jnp.float32)
            o_ref[...] = (out + b_ref[...]).astype(o_ref.dtype)          # (Bp, n_pad)

    return kernel


def _hw_budget():
    """Per-generation (streamed block bytes, scoped-VMEM limit).

    Physical VMEM: v5e/v6e = 128 MiB, v7x = 64 MiB per TensorCore.
    Default scoped limits (v5e: 16 MiB, v6e/v7x: 32 MiB) are too small for the
    large blocks we want, so we raise vmem_limit_bytes explicitly.
    """
    cap = None
    try:
        cap = getattr(pltpu.get_tpu_info(), "vmem_capacity_bytes", None)
    except Exception:
        cap = None
    if cap is None:
        cap = 64 << 20                      # conservative: assume v7x-per-TC size
    if cap >= (96 << 20):                   # v5e / v6e (128 MiB physical)
        return 16 << 20, 80 << 20
    return 10 << 20, 48 << 20               # v7x (64 MiB physical per TC)


def _choose_tile_s(Bp, C, S, itemsize, target_bytes):
    """Lane-multiple spatial tile sized to ~target_bytes per streamed block."""
    if S <= 128:
        return S
    st = (target_bytes // max(1, Bp * C * itemsize)) // 128 * 128
    if st >= S:
        return S
    st = max(128, st)
    # Prefer a 128-multiple divisor of S (removes the masked tail step) as long
    # as it does not shrink the block by more than ~2x.
    if S % 128 == 0:
        for m in range(st // 128, 0, -1):
            cand = m * 128
            if S % cand == 0:
                if cand * 2 >= st:
                    return cand
                break
    return st


def max_pooling_classifier_two_heads(x, params, *, tile_s=None, batch_blocks=None):
    """x: (B, C, H, W).  params: dict of per-head parameters."""
    B, C, H, W = x.shape
    S = H * W

    # Leading "parallel" grid axis over the batch (used by v7x's 2 TensorCores;
    # a plain serial outer loop with the same total work on 1-TC chips).
    if batch_blocks is None:
        batch_blocks = 2 if (B % 2 == 0 and B >= 2) else 1
    nb = max(1, batch_blocks)
    if B % nb != 0:
        nb = 1
    Bp = B // nb
    x4 = x.reshape(nb, Bp, C, S)

    g1, be1, W1, b1 = params["g1"], params["be1"], params["W1"], params["b1"]
    g2, be2, W2, b2 = params["g2"], params["be2"], params["W2"], params["b2"]
    n1, n2 = W1.shape[0], W2.shape[0]
    n = n1 + n2
    n_pad = pl.cdiv(n, 128) * 128

    # Fold LN affine into the Linear (in f32) and fuse + pad both heads:
    #   (xn*g + be) @ W.T + b == xn @ (g[:,None]*W.T) + (W @ be + b)
    f32 = jnp.float32
    Wc = jnp.concatenate(
        [g1.astype(f32)[:, None] * W1.T.astype(f32),
         g2.astype(f32)[:, None] * W2.T.astype(f32)], axis=1)            # (C, n)
    bc = jnp.concatenate(
        [W1.astype(f32) @ be1.astype(f32) + b1.astype(f32),
         W2.astype(f32) @ be2.astype(f32) + b2.astype(f32)])             # (n,)
    Wc = jnp.pad(Wc, ((0, 0), (0, n_pad - n)))                           # (C, n_pad)
    bc = jnp.pad(bc, (0, n_pad - n)).reshape(1, n_pad)                   # (1, n_pad)

    # Per-chip block budget; keep resident params/outputs inside the limit.
    target_bytes, vmem_limit = _hw_budget()
    resident = 4 * (2 * C * n_pad + 2 * n_pad + 2 * Bp * n_pad + Bp * C)
    x_budget = max(512 * 1024,
                   min(target_bytes, (vmem_limit - resident) // 2 - (1 << 20)))

    # Spatial tiling.
    if tile_s is None:
        tile_s = _choose_tile_s(Bp, C, S, jnp.dtype(x4.dtype).itemsize, x_budget)
    else:
        tile_s = min(tile_s, S)
        if tile_s < S:
            tile_s = max(128, (tile_s // 128) * 128)
    num_s = pl.cdiv(S, tile_s)

    out = pl.pallas_call(
        _make_kernel(S, tile_s),
        out_shape=jax.ShapeDtypeStruct((nb, Bp, n_pad), jnp.float32),
        grid=(nb, num_s),
        in_specs=[
            # streamed input block; leading batch-block dim squeezed away
            pl.BlockSpec((None, Bp, C, tile_s), lambda b, s: (b, 0, 0, s)),
            pl.BlockSpec((C, n_pad), lambda b, s: (0, 0)),     # resident fused W
            pl.BlockSpec((1, n_pad), lambda b, s: (0, 0)),     # resident fused b
        ],
        out_specs=pl.BlockSpec((None, Bp, n_pad), lambda b, s: (b, 0, 0)),
        scratch_shapes=[pltpu.VMEM((Bp, C), jnp.float32)],     # running-max acc
        compiler_params=pltpu.CompilerParams(
            dimension_semantics=("parallel", "arbitrary"),     # S is a reduction
            vmem_limit_bytes=vmem_limit),
    )(x4, Wc, bc)

    out = out.reshape(B, n_pad)
    return out[:, :n1], out[:, n1:n1 + n2]


def make_params(key, in_dim, n_classes1, n_classes2):
    k1, k2, k3, k4 = jax.random.split(key, 4)
    # LayerNorm init: gamma=1, beta=0 (torch default)
    g1 = jnp.ones((in_dim,), jnp.float32)
    be1 = jnp.zeros((in_dim,), jnp.float32)
    g2 = jnp.ones((in_dim,), jnp.float32)
    be2 = jnp.zeros((in_dim,), jnp.float32)
    # Linear init: uniform(-1/sqrt(in_dim), 1/sqrt(in_dim)) like torch
    bound = 1.0 / jnp.sqrt(jnp.float32(in_dim))
    W1 = jax.random.uniform(k1, (n_classes1, in_dim), jnp.float32, -bound, bound)
    b1 = jax.random.uniform(k2, (n_classes1,), jnp.float32, -bound, bound)
    W2 = jax.random.uniform(k3, (n_classes2, in_dim), jnp.float32, -bound, bound)
    b2 = jax.random.uniform(k4, (n_classes2,), jnp.float32, -bound, bound)
    return dict(g1=g1, be1=be1, W1=W1, b1=b1, g2=g2, be2=be2, W2=W2, b2=b2)


def reference(x, params):
    """Pure-JAX reference with the original (unfused) two-head structure."""
    B, C = x.shape[0], x.shape[1]
    pooled = jnp.max(x.reshape(B, C, -1), axis=-1)

    def head(g, be, W, b):
        mu = jnp.mean(pooled, axis=-1, keepdims=True)
        var = jnp.mean((pooled - mu) ** 2, axis=-1, keepdims=True)
        xn = (pooled - mu) / jnp.sqrt(var + LN_EPS)
        return (xn * g + be) @ W.T + b

    return (head(params["g1"], params["be1"], params["W1"], params["b1"]),
            head(params["g2"], params["be2"], params["W2"], params["b2"]))


if __name__ == "__main__":
    key = jax.random.PRNGKey(0)
    kx, kp, kx2 = jax.random.split(key, 3)

    # Case 1: even batch (exercises the parallel batch split), S a multiple of
    # 128 and tile_s=128 forces a 2-step spatial reduction (accumulator path).
    B, C, H, W = 2, 32, 16, 16        # in_dim = C = 32, S = 256
    n_classes1, n_classes2 = 8, 10
    x = jax.random.normal(kx, (B, C, H, W), jnp.float32)
    params = make_params(kp, C, n_classes1, n_classes2)

    out1, out2 = max_pooling_classifier_two_heads(x, params, tile_s=128)
    out1, out2 = jax.block_until_ready((out1, out2))
    ref1, ref2 = reference(x, params)
    assert out1.shape == (B, n_classes1) and out2.shape == (B, n_classes2)
    assert jnp.allclose(out1, ref1, atol=1e-4, rtol=1e-4)
    assert jnp.allclose(out2, ref2, atol=1e-4, rtol=1e-4)

    # Case 2: odd batch (no split) and S=144 with tile_s=128 -> exercises the
    # masked final-tile path that now only runs on the last grid step.
    B2, H2, W2_ = 3, 12, 12
    x2 = jax.random.normal(kx2, (B2, C, H2, W2_), jnp.float32)
    o1, o2 = max_pooling_classifier_two_heads(x2, params, tile_s=128)
    o1, o2 = jax.block_until_ready((o1, o2))
    r1, r2 = reference(x2, params)
    assert jnp.allclose(o1, r1, atol=1e-4, rtol=1e-4)
    assert jnp.allclose(o2, r2, atol=1e-4, rtol=1e-4)

    print("KERNEL_OK")
</pallas_src>

<mosaic_0001>
module attributes {stable_mosaic.version = 11 : i64} {
  func.func @kernel(%arg0: i32, %arg1: i32, %arg2: memref<1x1x32x128xf32, #tpu.memory_space<vmem>>, %arg3: memref<32x128xf32, #tpu.memory_space<vmem>>, %arg4: memref<1x128xf32, #tpu.memory_space<vmem>>, %arg5: memref<1x1x128xf32, #tpu.memory_space<vmem>>, %arg6: memref<1x32xf32, #tpu.memory_space<vmem>>) attributes {dimension_semantics = [#tpu.dimension_semantics<parallel>, #tpu.dimension_semantics<arbitrary>], iteration_bounds = array<i64: 2, 2>, scalar_prefetch = 0 : i64, scratch_operands = 1 : i64, tpu.core_type = #tpu.core_type<tc>, window_params = [{transform_indices = @transform_0, window_bounds = array<i64: 1, 1, 32, 128>}, {pipeline_mode = #tpu.pipeline_mode<synchronous>, transform_indices = @transform_1, window_bounds = array<i64: 32, 128>}, {pipeline_mode = #tpu.pipeline_mode<synchronous>, transform_indices = @transform_2, window_bounds = array<i64: 1, 128>}, {transform_indices = @transform_3, window_bounds = array<i64: 1, 1, 128>}]} {
    %c0_i32 = arith.constant 0 : i32
    %0 = arith.cmpi eq, %arg1, %c0_i32 : i32
    %1 = arith.extui %0 : i1 to i32
    %c0_i32_0 = arith.constant 0 : i32
    %2 = arith.cmpi ne, %1, %c0_i32_0 : i32
    scf.if %2 {
      %cst_9 = arith.constant 0xFF800000 : f32
      %12 = vector.broadcast %cst_9 : f32 to vector<1x32xf32>
      %c0_10 = arith.constant 0 : index
      %c0_11 = arith.constant 0 : index
      %13 = vector.load %arg6[%c0_10, %c0_11] : memref<1x32xf32, #tpu.memory_space<vmem>>, vector<1x32xf32>
      tpu.vector_store %arg6[%c0_10, %c0_11], %12 {strides = array<i32>} : memref<1x32xf32, #tpu.memory_space<vmem>>, vector<1x32xf32>,
    } else {
    }
    %c0 = arith.constant 0 : index
    %c0_1 = arith.constant 0 : index
    %c0_2 = arith.constant 0 : index
    %c0_3 = arith.constant 0 : index
    %3 = vector.load %arg2[%c0, %c0_1, %c0_2, %c0_3] : memref<1x1x32x128xf32, #tpu.memory_space<vmem>>, vector<1x1x32x128xf32>
    %4 = vector.shape_cast %3 : vector<1x1x32x128xf32> to vector<1x32x128xf32>
    %cst = arith.constant dense<0xFF800000> : vector<1x32xf32>
    %5 = vector.multi_reduction <maximumf>, %4, %cst [2] : vector<1x32x128xf32> to vector<1x32xf32>
    %c0_4 = arith.constant 0 : index
    %c0_5 = arith.constant 0 : index
    %6 = vector.load %arg6[%c0_4, %c0_5] : memref<1x32xf32, #tpu.memory_space<vmem>>, vector<1x32xf32>
    %7 = arith.maximumf %6, %5 : vector<1x32xf32>
    %c0_6 = arith.constant 0 : index
    %c0_7 = arith.constant 0 : index
    %8 = vector.load %arg6[%c0_6, %c0_7] : memref<1x32xf32, #tpu.memory_space<vmem>>, vector<1x32xf32>
    tpu.vector_store %arg6[%c0_6, %c0_7], %7 {strides = array<i32>} : memref<1x32xf32, #tpu.memory_space<vmem>>, vector<1x32xf32>,
    %c1_i32 = arith.constant 1 : i32
    %9 = arith.cmpi eq, %arg1, %c1_i32 : i32
    %10 = arith.extui %9 : i1 to i32
    %c0_i32_8 = arith.constant 0 : i32
    %11 = arith.cmpi ne, %10, %c0_i32_8 : i32
    scf.if %11 {
      %c0_9 = arith.constant 0 : index
      %c0_10 = arith.constant 0 : index
      %12 = vector.load %arg6[%c0_9, %c0_10] : memref<1x32xf32, #tpu.memory_space<vmem>>, vector<1x32xf32>
      %cst_11 = arith.constant dense<0.000000e+00> : vector<1xf32>
      %13 = vector.multi_reduction <add>, %12, %cst_11 [1] : vector<1x32xf32> to vector<1xf32>
      %14 = vector.shape_cast %13 : vector<1xf32> to vector<1x1xf32>
      %cst_12 = arith.constant 3.200000e+01 : f32
      %15 = vector.broadcast %cst_12 : f32 to vector<1x1xf32>
      %16 = arith.divf %14, %15 : vector<1x1xf32>
      %17 = vector.broadcast %16 : vector<1x1xf32> to vector<1x32xf32>
      %18 = arith.subf %12, %17 : vector<1x32xf32>
      %19 = arith.mulf %18, %18 : vector<1x32xf32>
      %cst_13 = arith.constant dense<0.000000e+00> : vector<1xf32>
      %20 = vector.multi_reduction <add>, %19, %cst_13 [1] : vector<1x32xf32> to vector<1xf32>
      %21 = vector.shape_cast %20 : vector<1xf32> to vector<1x1xf32>
      %cst_14 = arith.constant 3.200000e+01 : f32
      %22 = vector.broadcast %cst_14 : f32 to vector<1x1xf32>
      %23 = arith.divf %21, %22 : vector<1x1xf32>
      %24 = vector.broadcast %16 : vector<1x1xf32> to vector<1x32xf32>
      %25 = arith.subf %12, %24 : vector<1x32xf32>
      %cst_15 = arith.constant 9.99999974E-6 : f32
      %26 = vector.broadcast %cst_15 : f32 to vector<1x1xf32>
      %27 = arith.addf %23, %26 : vector<1x1xf32>
      %28 = math.rsqrt %27 : vector<1x1xf32>
      %29 = vector.broadcast %28 : vector<1x1xf32> to vector<1x32xf32>
      %30 = arith.mulf %25, %29 : vector<1x32xf32>
      %c0_16 = arith.constant 0 : index
      %c0_17 = arith.constant 0 : index
      %31 = vector.load %arg3[%c0_16, %c0_17] : memref<32x128xf32, #tpu.memory_space<vmem>>, vector<32x128xf32>
      %cst_18 = arith.constant dense<0.000000e+00> : vector<1x128xf32>
      %32 = tpu.matmul %30, %31, %cst_18 {dimension_numbers = #tpu.dot_dimension_numbers<[1], [0], [0], [1], [0, 0, 1, 1], [], []>} : vector<1x32xf32>, vector<32x128xf32>, vector<1x128xf32> -> vector<1x128xf32>
      %c0_19 = arith.constant 0 : index
      %c0_20 = arith.constant 0 : index
      %33 = vector.load %arg4[%c0_19, %c0_20] : memref<1x128xf32, #tpu.memory_space<vmem>>, vector<1x128xf32>
      %34 = arith.addf %32, %33 : vector<1x128xf32>
      %c0_21 = arith.constant 0 : index
      %c0_22 = arith.constant 0 : index
      %c0_23 = arith.constant 0 : index
      %35 = vector.load %arg5[%c0_21, %c0_22, %c0_23] : memref<1x1x128xf32, #tpu.memory_space<vmem>>, vector<1x1x128xf32>
      %36 = vector.shape_cast %35 : vector<1x1x128xf32> to vector<1x128xf32>
      %37 = vector.shape_cast %34 : vector<1x128xf32> to vector<1x1x128xf32>
      tpu.vector_store %arg5[%c0_21, %c0_22, %c0_23], %37 {strides = array<i32>} : memref<1x1x128xf32, #tpu.memory_space<vmem>>, vector<1x1x128xf32>,
    } else {
    }
    return
  }
  func.func @transform_0(%arg0: i32, %arg1: i32) -> (i32, i32, i32, i32) {
    %c0_i32 = arith.constant 0 : i32
    %c0_i32_0 = arith.constant 0 : i32
    %c0_i32_1 = arith.constant 0 : i32
    return %arg0, %c0_i32, %c0_i32_0, %arg1 : i32, i32, i32, i32
  }
  func.func @transform_1(%arg0: i32, %arg1: i32) -> (i32, i32) {
    %c0_i32 = arith.constant 0 : i32
    %c0_i32_0 = arith.constant 0 : i32
    %c0_i32_1 = arith.constant 0 : i32
    return %c0_i32, %c0_i32_0 : i32, i32
  }
  func.func @transform_2(%arg0: i32, %arg1: i32) -> (i32, i32) {
    %c0_i32 = arith.constant 0 : i32
    %c0_i32_0 = arith.constant 0 : i32
    %c0_i32_1 = arith.constant 0 : i32
    return %c0_i32, %c0_i32_0 : i32, i32
  }
  func.func @transform_3(%arg0: i32, %arg1: i32) -> (i32, i32, i32) {
    %c0_i32 = arith.constant 0 : i32
    %c0_i32_0 = arith.constant 0 : i32
    %c0_i32_1 = arith.constant 0 : i32
    return %arg0, %c0_i32, %c0_i32_0 : i32, i32, i32
  }
}

</mosaic_0001>

<llo_original>
// kernel: tpu_custom_call.1
$region0: #{tpu_custom_call.1}
  #allocation0 [shape = 'u32[]', space=smem, size = 0x4, offset = 0x4, fixed_abs, tag = 'smem constant byte address 0x4 - core index']
  #allocation1 [shape = 'u32[144,128]{1,0:T(1,128)}', space=vmem, size = 0x12000, scoped, tag = 'internal scratch']
  #allocation2 [shape = 'f32[1,32]{1,0:T(1,128)}', space=vmem, size = 0x200, scoped, tag = 'scratch operand']
  %s0 = inlined_call_operand.hbm [shape: f32[2,1,32,256], index: 0, kind: input, shape index: {}]
  %s1 = inlined_call_operand.hbm [shape: f32[32,128], index: 1, kind: input, shape index: {}]
  %s2 = inlined_call_operand.vmem [shape: f32[1,128], index: 2, kind: input, shape index: {}]
  %s3 = inlined_call_operand.hbm [shape: f32[2,1,128], index: 3, kind: output, shape index: {}]
  %s4 = sld [smem:[#allocation0]]
  $region61: #{tpu_custom_call.1} parent=0
    _
  %s6 = ssub.s32 1, %s4
  %s7 = scalar_select 0, %s6, %s4
  $region1: #{tpu_custom_call.1} parent=0
    #allocation3 [shape = 'u8[32768]{0}', space=vmem, size = 0x8000, scoped, tag = 'input window, operand 0']
    #allocation4 [shape = 's32[2]{0}', space=sflag, size = 0x8, scoped, tag = 'scoped memory for tpu_custom_call.1']
    #allocation5 [shape = 's32[2]{0}', space=sflag, size = 0x8, scoped, tag = 'scoped memory for tpu_custom_call.1']
    #allocation6 [shape = 'u8[16384]{0}', space=vmem, size = 0x4000, scoped, tag = 'input window, operand 1, single buffered']
    #allocation7 [shape = 's32[1]{0}', space=sflag, size = 0x4, scoped, tag = 'scoped memory for tpu_custom_call.1']
    #allocation8 [shape = 'u8[1024]{0}', space=vmem, size = 0x400, scoped, tag = 'output window, operand 0']
    %8 = vsyncpa [#allocation4], 0
    %s9 = scalar_lea.sflag [#allocation4], 1
    %10 = vsyncpa %s9, 0
    %11 = vsyncpa [#allocation7], 0
    %12 = vsyncpa [#allocation5], 0
    %s13 = scalar_lea.sflag [#allocation5], 1
    %14 = vsyncpa %s13, 0
    loop: start=0, step=1, limit=6
    $region2: #{tpu_custom_call.1} parent=1 // loop_pre_header
      _
    $region3: #{tpu_custom_call.1} parent=1 // loop_header
      %s16 = sphi 0, %s20
      %p17 = scmp.ge.s32.totalorder %s16, 6
      %s23 = sphi 0, %s35
      %s24 = sphi 0, %s31
      %s25 = sphi 0, %s23
      %s26 = sphi 0, %s24
      %s27 = sphi 0, %s25
      %s28 = sphi 0, %s26
      %s40 = sphi 0, %s42
      %s43 = sphi 0, %s40
      %s44 = sphi 0, %s43
      %s60 = sphi 0, %s44
      %s64 = sphi 0, %s64
      %s66 = sphi 0, %s64
      %s67 = sphi 0, %s66
      %s81 = sphi 0, %s67
      %s85 = sphi 0, %s85
      %s87 = sphi 0, %s85
      %s88 = sphi 0, %s87
      %s102 = sphi 0, %s88
      %s108 = sphi 0, %s110
      %s111 = sphi 0, %s108
      %s112 = sphi 0, %s111
      %s128 = sphi 0, %s112
    $region4: #{tpu_custom_call.1} parent=1 // loop_header_branch
      %19 = sbr.rel (%p17) target = $region8
    $region5: #{tpu_custom_call.1} parent=1 // loop_body
      %s21 = ssub.s32 %s16, 1
      %s22 = ssub.s32 %s16, 2
      %s29 = sadd.s32 1, %s24
      %p30 = scmp.ge.s32.totalorder %s29, 2
      %s31 = scalar_select %p30, 0, %s29
      %s32 = sadd.s32 1, %s23
      %s33 = scalar_select %p30, %s32, %s23
      %p34 = scmp.ge.s32.totalorder %s33, 2
      %s35 = scalar_select %p34, 0, %s33
      %s36 = ssub.s32 %s23, %s35
      %s37 = ssub.s32 %s24, %s31
      %s38 = sor.u32 %s36, %s37
      %p39 = scmp.eq.s32.totalorder %s38, 0
      %s41 = sadd.s32 %s40, 1
      %s42 = scalar_select %p39, %s40, %s41
      %p45 = pneg %p39
      %p46 = scmp.eq.s32.totalorder %s16, 3
      %p47 = por %p45, %p46
      %p48 = scmp.ne.s32.totalorder %s40, %s43
      %p49 = scmp.eq.s32.totalorder %s16, 0
      %p50 = por %p48, %p49
      %p51 = scmp.ne.s32.totalorder %s40, %s43
      %p52 = scmp.eq.s32.totalorder %s21, 3
      %p53 = por %p51, %p52
      %p54 = scmp.ne.s32.totalorder %s43, %s44
      %p55 = scmp.eq.s32.totalorder %s21, 0
      %p56 = por %p54, %p55
      %p57 = scmp.ne.s32.totalorder %s43, %s44
      %p58 = scmp.eq.s32.totalorder %s22, 3
      %p59 = por %p57, %p58
      %p61 = scmp.ne.s32.totalorder %s44, %s60
      %p62 = scmp.eq.s32.totalorder %s22, 0
      %p63 = por %p61, %p62
      %s65 = sadd.s32 %s64, 1
      %p68 = scmp.eq.s32.totalorder %s16, 3
      %p69 = scmp.ne.s32.totalorder %s64, %s66
      %p70 = scmp.eq.s32.totalorder %s16, 0
      %p71 = por %p69, %p70
      %p72 = scmp.ne.s32.totalorder %s64, %s66
      %p73 = scmp.eq.s32.totalorder %s21, 3
      %p74 = por %p72, %p73
      %p75 = scmp.ne.s32.totalorder %s66, %s67
      %p76 = scmp.eq.s32.totalorder %s21, 0
      %p77 = por %p75, %p76
      %p78 = scmp.ne.s32.totalorder %s66, %s67
      %p79 = scmp.eq.s32.totalorder %s22, 3
      %p80 = por %p78, %p79
      %p82 = scmp.ne.s32.totalorder %s67, %s81
      %p83 = scmp.eq.s32.totalorder %s22, 0
      %p84 = por %p82, %p83
      %s86 = sadd.s32 %s85, 1
      %p89 = scmp.eq.s32.totalorder %s16, 3
      %p90 = scmp.ne.s32.totalorder %s85, %s87
      %p91 = scmp.eq.s32.totalorder %s16, 0
      %p92 = por %p90, %p91
      %p93 = scmp.ne.s32.totalorder %s85, %s87
      %p94 = scmp.eq.s32.totalorder %s21, 3
      %p95 = por %p93, %p94
      %p96 = scmp.ne.s32.totalorder %s87, %s88
      %p97 = scmp.eq.s32.totalorder %s21, 0
      %p98 = por %p96, %p97
      %p99 = scmp.ne.s32.totalorder %s87, %s88
      %p100 = scmp.eq.s32.totalorder %s22, 3
      %p101 = por %p99, %p100
      %p103 = scmp.ne.s32.totalorder %s88, %s102
      %p104 = scmp.eq.s32.totalorder %s22, 0
      %p105 = por %p103, %p104
      %s106 = ssub.s32 %s23, %s35
      %p107 = scmp.eq.s32.totalorder %s106, 0
      %s109 = sadd.s32 %s108, 1
      %s110 = scalar_select %p107, %s108, %s109
      %p113 = pneg %p107
      %p114 = scmp.eq.s32.totalorder %s16, 3
      %p115 = por %p113, %p114
      %p116 = scmp.ne.s32.totalorder %s108, %s111
      %p117 = scmp.eq.s32.totalorder %s16, 0
      %p118 = por %p116, %p117
      %p119 = scmp.ne.s32.totalorder %s108, %s111
      %p120 = scmp.eq.s32.totalorder %s21, 3
      %p121 = por %p119, %p120
      %p122 = scmp.ne.s32.totalorder %s111, %s112
      %p123 = scmp.eq.s32.totalorder %s21, 0
      %p124 = por %p122, %p123
      %p125 = scmp.ne.s32.totalorder %s111, %s112
      %p126 = scmp.eq.s32.totalorder %s22, 3
      %p127 = por %p125, %p126
      %p129 = scmp.ne.s32.totalorder %s112, %s128
      %p130 = scmp.eq.s32.totalorder %s22, 0
      %p131 = por %p129, %p130
      %p132 = scmp.le.s32.totalorder 1, %s16
      %p133 = scmp.lt.s32.totalorder %s16, 5
      %p134 = pnand %p132, %p133
      %p135 = pneg %p134
      // Predicated region
      $region9: #{tpu_custom_call.1} parent=5 // pred_check
        _
      $region10: #{tpu_custom_call.1} parent=5 // pred_check_branch
        %137 = sbr.rel (%p134) target = $region12
      $region11: #{tpu_custom_call.1} parent=5 // pred_region
        %s138 = ssub.s32 %s16, 1
        // Predicated region
        $region13: #{tpu_custom_call.1} parent=11 // pred_check
          %p139 = pneg %p77
        $region14: #{tpu_custom_call.1} parent=11 // pred_check_branch
          %141 = sbr.rel (%p139) target = $region16
        $region15: #{tpu_custom_call.1} parent=11 // pred_region
          %s143 = ssub.s32 512, 512
          %144 = vsyncadd [#allocation7], %s143
          %s145 = sshll.u32 [#allocation6], 4
          %s146 = int_to_ptr.vmem [resolvable:$true] %s145
          %151 = dma.hbm_to_vmem [thread:$0]  %s1, 512, %s146, [#allocation7], 128, 128, 8
        $region16: #{tpu_custom_call.1} parent=11 // pred_fallthru
          _
        // Predicated region
        $region17: #{tpu_custom_call.1} parent=11 // pred_check
          %p152 = pneg %p98
        $region18: #{tpu_custom_call.1} parent=11 // pred_check_branch
          %154 = sbr.rel (%p152) target = $region20
        $region19: #{tpu_custom_call.1} parent=11 // pred_region
          _
        $region20: #{tpu_custom_call.1} parent=11 // pred_fallthru
          _
      $region12: #{tpu_custom_call.1} parent=5 // pred_fallthru
        _
      %p155 = scmp.lt.s32.totalorder %s16, 4
      // Predicated region
      $region21: #{tpu_custom_call.1} parent=5 // pred_check
        %p156 = pneg %p155
      $region22: #{tpu_custom_call.1} parent=5 // pred_check_branch
        %158 = sbr.rel (%p156) target = $region24
      $region23: #{tpu_custom_call.1} parent=5 // pred_region
        // Predicated region
        $region25: #{tpu_custom_call.1} parent=23 // pred_check
          %p159 = pneg %p50
        $region26: #{tpu_custom_call.1} parent=23 // pred_check_branch
          %161 = sbr.rel (%p159) target = $region28
        $region27: #{tpu_custom_call.1} parent=23 // pred_region
          %s162 = sand.u32 %s40, 1
          %s163 = scalar_lea.sflag [#allocation4], %s162
          %s164 = sand.u32 %s40, 1
          %s165 = smul.addr %s164, 32
          %s166 = scalar_lea.vmem [#allocation3], %s165
          %s168 = ssub.s32 512, 512
          %169 = vsyncadd %s163, %s168
          %s170 = smul.addr %s23, 8
          %s171 = sadd.s32 %s24, %s170
          %s172 = smul.addr %s171, 128
          %s173 = scalar_lea.hbm %s0, %s172
          %s174 = sshll.u32 %s166, 4
          %s175 = int_to_ptr.vmem [resolvable:$true] %s174
          %180 = dma.hbm_to_vmem [thread:$0]  %s173, 512, %s175, %s163, 256, 128, 8
        $region28: #{tpu_custom_call.1} parent=23 // pred_fallthru
          _
      $region24: #{tpu_custom_call.1} parent=5 // pred_fallthru
        _
      %p181 = scmp.le.s32.totalorder 1, %s16
      %p182 = scmp.lt.s32.totalorder %s16, 5
      %p183 = pnand %p181, %p182
      %p184 = pneg %p183
      // Predicated region
      $region29: #{tpu_custom_call.1} parent=5 // pred_check
        _
      $region30: #{tpu_custom_call.1} parent=5 // pred_check_branch
        %186 = sbr.rel (%p183) target = $region32
      $region31: #{tpu_custom_call.1} parent=5 // pred_region
        %s187 = ssub.s32 %s16, 1
        %s188 = sand.u32 %s43, 1
        %s189 = scalar_lea.sflag [#allocation4], %s188
        %s190 = sand.u32 %s43, 1
        %s191 = smul.addr %s190, 32
        %s192 = scalar_lea.vmem [#allocation3], %s191
        // Predicated region
        $region33: #{tpu_custom_call.1} parent=31 // pred_check
          %p193 = pneg %p56
        $region34: #{tpu_custom_call.1} parent=31 // pred_check_branch
          %195 = sbr.rel (%p193) target = $region36
        $region35: #{tpu_custom_call.1} parent=31 // pred_region
          %196 = dma.done %s189, 512
        $region36: #{tpu_custom_call.1} parent=31 // pred_fallthru
          _
        // Predicated region
        $region37: #{tpu_custom_call.1} parent=31 // pred_check
          %p197 = pneg %p77
        $region38: #{tpu_custom_call.1} parent=31 // pred_check_branch
          %199 = sbr.rel (%p197) target = $region40
        $region39: #{tpu_custom_call.1} parent=31 // pred_region
          %200 = dma.done [#allocation7], 512
        $region40: #{tpu_custom_call.1} parent=31 // pred_fallthru
          _
        %s201 = sand.u32 %s43, 1
        %s202 = scalar_lea.sflag [#allocation4], %s201
        %s203 = sand.u32 %s43, 1
        %s204 = smul.addr %s203, 32
        %s205 = scalar_lea.vmem [#allocation3], %s204
        %p206 = pneg %p56
        %p207 = pneg %p53
        %p208 = pneg %p77
        %p209 = pneg %p74
        %p210 = pneg %p98
        %p211 = pneg %p95
        %p212 = pneg %p124
        %p213 = pneg %p121
        %s214 = sand.u32 %s111, 1
        %s215 = scalar_lea.sflag [#allocation5], %s214
        %s216 = sand.u32 %s111, 1
        %s217 = scalar_lea.vmem [#allocation8], %s216
        %p218 = scmp.eq.s32.totalorder %s26, 0
        // Predicated region
        $region41: #{tpu_custom_call.1} parent=31 // pred_check
          %p219 = pneg %p218
        $region42: #{tpu_custom_call.1} parent=31 // pred_check_branch
          %221 = sbr.rel (%p219) target = $region44
        $region43: #{tpu_custom_call.1} parent=31 // pred_region
          %vm222 = vcmask 253952
          %223 = vst.msk [vmem:[#allocation2] sm:$0x1] %vm222, -inf
        $region44: #{tpu_custom_call.1} parent=31 // pred_fallthru
          _
        %v224 = vld [vmem:[%s192] sm:$0xff]
        %v225 = vld [vmem:[%s192 + $0x8] sm:$0xff]
        %v226 = vld [vmem:[%s192 + $0x10] sm:$0xff]
        %v227 = vld [vmem:[%s192 + $0x18] sm:$0xff]
        %228 = vmax.xlane.f32.xlu0 %v224
        %v229 = vpop.xlane.xlu0 %228
        %230 = vmax.xlane.f32.xlu0 %v225
        %v231 = vpop.xlane.xlu0 %230
        %232 = vmax.xlane.f32.xlu0 %v226
        %v233 = vpop.xlane.xlu0 %232
        %234 = vmax.xlane.f32.xlu0 %v227
        %v235 = vpop.xlane.xlu0 %234
        %v236 = vld [vmem:[#allocation2] sm:$0x1]
        %v241 = vlaneseq
        %v242 = vshrl.u32 %v241, 7
        %v243 = vsub.s32 0, %v242
        %v244 = vrot.slane %v229, %v243
        %v245 = vlaneseq
        %v246 = vshrl.u32 %v245, 7
        %v247 = vsub.s32 1, %v246
        %v248 = vrot.slane %v229, %v247
        %v249 = vlaneseq
        %v250 = vshrl.u32 %v249, 7
        %v251 = vsub.s32 2, %v250
        %v252 = vrot.slane %v229, %v251
        %v253 = vlaneseq
        %v254 = vshrl.u32 %v253, 7
        %v255 = vsub.s32 3, %v254
        %v256 = vrot.slane %v229, %v255
        %v257 = vlaneseq
        %v258 = vshrl.u32 %v257, 7
        %v259 = vsub.s32 4, %v258
        %v260 = vrot.slane %v229, %v259
        %v261 = vlaneseq
        %v262 = vshrl.u32 %v261, 7
        %v263 = vsub.s32 5, %v262
        %v264 = vrot.slane %v229, %v263
        %v265 = vlaneseq
        %v266 = vshrl.u32 %v265, 7
        %v267 = vsub.s32 6, %v266
        %v268 = vrot.slane %v229, %v267
        %v269 = vlaneseq
        %v270 = vshrl.u32 %v269, 7
        %v271 = vsub.s32 7, %v270
        %v272 = vrot.slane %v229, %v271
        %v273 = vlaneseq
        %v274 = vshrl.u32 %v273, 7
        %v275 = vsub.s32 0, %v274
        %v276 = vrot.slane %v231, %v275
        %v277 = vlaneseq
        %v278 = vshrl.u32 %v277, 7
        %v279 = vsub.s32 1, %v278
        %v280 = vrot.slane %v231, %v279
        %v281 = vlaneseq
        %v282 = vshrl.u32 %v281, 7
        %v283 = vsub.s32 2, %v282
        %v284 = vrot.slane %v231, %v283
        %v285 = vlaneseq
        %v286 = vshrl.u32 %v285, 7
        %v287 = vsub.s32 3, %v286
        %v288 = vrot.slane %v231, %v287
        %v289 = vlaneseq
        %v290 = vshrl.u32 %v289, 7
        %v291 = vsub.s32 4, %v290
        %v292 = vrot.slane %v231, %v291
        %v293 = vlaneseq
        %v294 = vshrl.u32 %v293, 7
        %v295 = vsub.s32 5, %v294
        %v296 = vrot.slane %v231, %v295
        %v297 = vlaneseq
        %v298 = vshrl.u32 %v297, 7
        %v299 = vsub.s32 6, %v298
        %v300 = vrot.slane %v231, %v299
        %v301 = vlaneseq
        %v302 = vshrl.u32 %v301, 7
        %v303 = vsub.s32 7, %v302
        %v304 = vrot.slane %v231, %v303
        %v305 = vlaneseq
        %v306 = vshrl.u32 %v305, 7
        %v307 = vsub.s32 0, %v306
        %v308 = vrot.slane %v233, %v307
        %v309 = vlaneseq
        %v310 = vshrl.u32 %v309, 7
        %v311 = vsub.s32 1, %v310
        %v312 = vrot.slane %v233, %v311
        %v313 = vlaneseq
        %v314 = vshrl.u32 %v313, 7
        %v315 = vsub.s32 2, %v314
        %v316 = vrot.slane %v233, %v315
        %v317 = vlaneseq
        %v318 = vshrl.u32 %v317, 7
        %v319 = vsub.s32 3, %v318
        %v320 = vrot.slane %v233, %v319
        %v321 = vlaneseq
        %v322 = vshrl.u32 %v321, 7
        %v323 = vsub.s32 4, %v322
        %v324 = vrot.slane %v233, %v323
        %v325 = vlaneseq
        %v326 = vshrl.u32 %v325, 7
        %v327 = vsub.s32 5, %v326
        %v328 = vrot.slane %v233, %v327
        %v329 = vlaneseq
        %v330 = vshrl.u32 %v329, 7
        %v331 = vsub.s32 6, %v330
        %v332 = vrot.slane %v233, %v331
        %v333 = vlaneseq
        %v334 = vshrl.u32 %v333, 7
        %v335 = vsub.s32 7, %v334
        %v336 = vrot.slane %v233, %v335
        %v337 = vlaneseq
        %v338 = vshrl.u32 %v337, 7
        %v339 = vsub.s32 0, %v338
        %v340 = vrot.slane %v235, %v339
        %v341 = vlaneseq
        %v342 = vshrl.u32 %v341, 7
        %v343 = vsub.s32 1, %v342
        %v344 = vrot.slane %v235, %v343
        %v345 = vlaneseq
        %v346 = vshrl.u32 %v345, 7
        %v347 = vsub.s32 2, %v346
        %v348 = vrot.slane %v235, %v347
        %v349 = vlaneseq
        %v350 = vshrl.u32 %v349, 7
        %v351 = vsub.s32 3, %v350
        %v352 = vrot.slane %v235, %v351
        %v353 = vlaneseq
        %v354 = vshrl.u32 %v353, 7
        %v355 = vsub.s32 4, %v354
        %v356 = vrot.slane %v235, %v355
        %v357 = vlaneseq
        %v358 = vshrl.u32 %v357, 7
        %v359 = vsub.s32 5, %v358
        %v360 = vrot.slane %v235, %v359
        %v361 = vlaneseq
        %v362 = vshrl.u32 %v361, 7
        %v363 = vsub.s32 6, %v362
        %v364 = vrot.slane %v235, %v363
        %v365 = vlaneseq
        %v366 = vshrl.u32 %v365, 7
        %v367 = vsub.s32 7, %v366
        %v368 = vrot.slane %v235, %v367
        %v369 = vcombine.low %v244, %v248
        %v370 = vcombine.low %v252, %v256
        %v371 = vcombine.low %v260, %v264
        %v372 = vcombine.low %v268, %v272
        %v374 = vunpack.c.l.s4 1966171168
        %v375 = vunpack.c.0.s8 %v374
        %v376 = vlaneseq
        %v377 = vshrl.u32 %v376, 7
        %v378 = vsub.s32 %v375, %v377
        %v379 = vrot.slane %v369, %v378
        %v381 = vunpack.c.l.s4 1966171168
        %v382 = vunpack.c.0.s8 %v381
        %v383 = vlaneseq
        %v384 = vshrl.u32 %v383, 7
        %v385 = vsub.s32 %v382, %v384
        %v386 = vrot.slane %v370, %v385
        %v388 = vunpack.c.l.s4 1966171168
        %v389 = vunpack.c.0.s8 %v388
        %v390 = vlaneseq
        %v391 = vshrl.u32 %v390, 7
        %v392 = vsub.s32 %v389, %v391
        %v393 = vrot.slane %v371, %v392
        %v395 = vunpack.c.l.s4 1966171168
        %v396 = vunpack.c.0.s8 %v395
        %v397 = vlaneseq
        %v398 = vshrl.u32 %v397, 7
        %v399 = vsub.s32 %v396, %v398
        %v400 = vrot.slane %v372, %v399
        %v401 = vcombine.low %v379, %v386
        %v402 = vcombine.low %v393, %v400
        %v404 = vunpack.c.l.s4 1966171168
        %v405 = vunpack.c.0.s8 %v404
        %v406 = vlaneseq
        %v407 = vshrl.u32 %v406, 7
        %v408 = vsub.s32 %v405, %v407
        %v409 = vrot.slane %v401, %v408
        %v411 = vunpack.c.l.s4 1966171168
        %v412 = vunpack.c.0.s8 %v411
        %v413 = vlaneseq
        %v414 = vshrl.u32 %v413, 7
        %v415 = vsub.s32 %v412, %v414
        %v416 = vrot.slane %v402, %v415
        %v417 = vcombine.low %v409, %v416
        %v418 = vcombine.low %v276, %v280
        %v419 = vcombine.low %v284, %v288
        %v420 = vcombine.low %v292, %v296
        %v421 = vcombine.low %v300, %v304
        %v423 = vunpack.c.l.s4 1966171168
        %v424 = vunpack.c.0.s8 %v423
        %v425 = vlaneseq
        %v426 = vshrl.u32 %v425, 7
        %v427 = vsub.s32 %v424, %v426
        %v428 = vrot.slane %v418, %v427
        %v430 = vunpack.c.l.s4 1966171168
        %v431 = vunpack.c.0.s8 %v430
        %v432 = vlaneseq
        %v433 = vshrl.u32 %v432, 7
        %v434 = vsub.s32 %v431, %v433
        %v435 = vrot.slane %v419, %v434
        %v437 = vunpack.c.l.s4 1966171168
        %v438 = vunpack.c.0.s8 %v437
        %v439 = vlaneseq
        %v440 = vshrl.u32 %v439, 7
        %v441 = vsub.s32 %v438, %v440
        %v442 = vrot.slane %v420, %v441
        %v444 = vunpack.c.l.s4 1966171168
        %v445 = vunpack.c.0.s8 %v444
        %v446 = vlaneseq
        %v447 = vshrl.u32 %v446, 7
        %v448 = vsub.s32 %v445, %v447
        %v449 = vrot.slane %v421, %v448
        %v450 = vcombine.low %v428, %v435
        %v451 = vcombine.low %v442, %v449
        %v453 = vunpack.c.l.s4 1966171168
        %v454 = vunpack.c.0.s8 %v453
        %v455 = vlaneseq
        %v456 = vshrl.u32 %v455, 7
        %v457 = vsub.s32 %v454, %v456
        %v458 = vrot.slane %v450, %v457
        %v460 = vunpack.c.l.s4 1966171168
        %v461 = vunpack.c.0.s8 %v460
        %v462 = vlaneseq
        %v463 = vshrl.u32 %v462, 7
        %v464 = vsub.s32 %v461, %v463
        %v465 = vrot.slane %v451, %v464
        %v466 = vcombine.low %v458, %v465
        %v467 = vcombine.low %v308, %v312
        %v468 = vcombine.low %v316, %v320
        %v469 = vcombine.low %v324, %v328
        %v470 = vcombine.low %v332, %v336
        %v472 = vunpack.c.l.s4 1966171168
        %v473 = vunpack.c.0.s8 %v472
        %v474 = vlaneseq
        %v475 = vshrl.u32 %v474, 7
        %v476 = vsub.s32 %v473, %v475
        %v477 = vrot.slane %v467, %v476
        %v479 = vunpack.c.l.s4 1966171168
        %v480 = vunpack.c.0.s8 %v479
        %v481 = vlaneseq
        %v482 = vshrl.u32 %v481, 7
        %v483 = vsub.s32 %v480, %v482
        %v484 = vrot.slane %v468, %v483
        %v486 = vunpack.c.l.s4 1966171168
        %v487 = vunpack.c.0.s8 %v486
        %v488 = vlaneseq
        %v489 = vshrl.u32 %v488, 7
        %v490 = vsub.s32 %v487, %v489
        %v491 = vrot.slane %v469, %v490
        %v493 = vunpack.c.l.s4 1966171168
        %v494 = vunpack.c.0.s8 %v493
        %v495 = vlaneseq
        %v496 = vshrl.u32 %v495, 7
        %v497 = vsub.s32 %v494, %v496
        %v498 = vrot.slane %v470, %v497
        %v499 = vcombine.low %v477, %v484
        %v500 = vcombine.low %v491, %v498
        %v502 = vunpack.c.l.s4 1966171168
        %v503 = vunpack.c.0.s8 %v502
        %v504 = vlaneseq
        %v505 = vshrl.u32 %v504, 7
        %v506 = vsub.s32 %v503, %v505
        %v507 = vrot.slane %v499, %v506
        %v509 = vunpack.c.l.s4 1966171168
        %v510 = vunpack.c.0.s8 %v509
        %v511 = vlaneseq
        %v512 = vshrl.u32 %v511, 7
        %v513 = vsub.s32 %v510, %v512
        %v514 = vrot.slane %v500, %v513
        %v515 = vcombine.low %v507, %v514
        %v516 = vcombine.low %v340, %v344
        %v517 = vcombine.low %v348, %v352
        %v518 = vcombine.low %v356, %v360
        %v519 = vcombine.low %v364, %v368
        %v521 = vunpack.c.l.s4 1966171168
        %v522 = vunpack.c.0.s8 %v521
        %v523 = vlaneseq
        %v524 = vshrl.u32 %v523, 7
        %v525 = vsub.s32 %v522, %v524
        %v526 = vrot.slane %v516, %v525
        %v528 = vunpack.c.l.s4 1966171168
        %v529 = vunpack.c.0.s8 %v528
        %v530 = vlaneseq
        %v531 = vshrl.u32 %v530, 7
        %v532 = vsub.s32 %v529, %v531
        %v533 = vrot.slane %v517, %v532
        %v535 = vunpack.c.l.s4 1966171168
        %v536 = vunpack.c.0.s8 %v535
        %v537 = vlaneseq
        %v538 = vshrl.u32 %v537, 7
        %v539 = vsub.s32 %v536, %v538
        %v540 = vrot.slane %v518, %v539
        %v542 = vunpack.c.l.s4 1966171168
        %v543 = vunpack.c.0.s8 %v542
        %v544 = vlaneseq
        %v545 = vshrl.u32 %v544, 7
        %v546 = vsub.s32 %v543, %v545
        %v547 = vrot.slane %v519, %v546
        %v548 = vcombine.low %v526, %v533
        %v549 = vcombine.low %v540, %v547
        %v551 = vunpack.c.l.s4 1966171168
        %v552 = vunpack.c.0.s8 %v551
        %v553 = vlaneseq
        %v554 = vshrl.u32 %v553, 7
        %v555 = vsub.s32 %v552, %v554
        %v556 = vrot.slane %v548, %v555
        %v558 = vunpack.c.l.s4 1966171168
        %v559 = vunpack.c.0.s8 %v558
        %v560 = vlaneseq
        %v561 = vshrl.u32 %v560, 7
        %v562 = vsub.s32 %v559, %v561
        %v563 = vrot.slane %v549, %v562
        %v564 = vcombine.low %v556, %v563
        %565 = vset.pattern.permute.xlu0 0
        %566 = vperm.xlu0 %565, %v417
        %v567 = vpop.permute.xlu0 %566
        %568 = vset.pattern.permute.xlu0 0
        %569 = vperm.xlu0 %568, %v466
        %v570 = vpop.permute.xlu0 %569
        %571 = vset.pattern.permute.xlu0 0
        %572 = vperm.xlu0 %571, %v515
        %v573 = vpop.permute.xlu0 %572
        %574 = vset.pattern.permute.xlu0 0
        %575 = vperm.xlu0 %574, %v564
        %v576 = vpop.permute.xlu0 %575
        %v577 = vlaneseq
        %v578 = vand.u32 %v577, 127
        %v579 = vlaneseq
        %v580 = vshrl.u32 %v579, 7
        %v581 = vsub.s32 %v578, %v580
        %v582 = vrot.slane %v567, %v581
        %v583 = vadd.s32 %v578, 4294967288
        %v584 = vlaneseq
        %v585 = vshrl.u32 %v584, 7
        %v586 = vsub.s32 %v583, %v585
        %v587 = vrot.slane %v570, %v586
        %vm588 = vcmask 130112
        %v589 = vsel %vm588, %v587, %v582
        %v590 = vadd.s32 %v578, 4294967280
        %v591 = vlaneseq
        %v592 = vshrl.u32 %v591, 7
        %v593 = vsub.s32 %v590, %v592
        %v594 = vrot.slane %v573, %v593
        %vm595 = vcmask 195712
        %v596 = vsel %vm595, %v594, %v589
        %v597 = vadd.s32 %v578, 4294967272
        %v598 = vlaneseq
        %v599 = vshrl.u32 %v598, 7
        %v600 = vsub.s32 %v597, %v599
        %v601 = vrot.slane %v576, %v600
        %vm602 = vcmask 261312
        %v603 = vsel %vm602, %v601, %v596
        %v605 = vunpack.c.l.s4 1966171168
        %v606 = vunpack.c.0.s8 %v605
        %v607 = vlaneseq
        %v608 = vshrl.u32 %v607, 7
        %v609 = vsub.s32 %v606, %v608
        %v610 = vrot.slane %v603, %v609
        %v612 = vunpack.c.l.s4 1966171168
        %v613 = vunpack.c.0.s8 %v612
        %v614 = vlaneseq
        %v615 = vshrl.u32 %v614, 7
        %v616 = vsub.s32 %v613, %v615
        %v617 = vrot.slane %v610, %v616
        %v619 = vmax.f32 %v236, %v617
        %vm620 = vcmask 253952
        %621 = vst.msk [vmem:[#allocation2] sm:$0x1] %vm620, %v619
        %p622 = scmp.eq.s32.totalorder %s26, 1
        // Predicated region
        $region45: #{tpu_custom_call.1} parent=31 // pred_check
          %p623 = pneg %p622
        $region46: #{tpu_custom_call.1} parent=31 // pred_check_branch
          %625 = sbr.rel (%p623) target = $region48
        $region47: #{tpu_custom_call.1} parent=31 // pred_region
          %v626 = vld [vmem:[#allocation2] sm:$0x1]
          %v627 = vsel %vm620, %v626, 0.0
          %628 = vadd.xlane.f32.xlu0 %v627
          %v629 = vpop.xlane.xlu0 %628
          %v630 = vrcp.pop 32.0
          %v631 = vmul.f32 %v629, %v630
          %v632 = vsub.f32 %v626, %v631
          %v633 = vmul.f32 %v632, %v632
          %v634 = vsel %vm620, %v633, 0.0
          %635 = vadd.xlane.f32.xlu0 %v634
          %v636 = vpop.xlane.xlu0 %635
          %v637 = vmul.f32 %v636, %v630
          %v638 = vadd.f32 %v637, 1e-05
          %v639 = vrsqrt.pop %v638
          %v640 = vmul.f32 %v632, %v639
          %v641 = vld [vmem:[#allocation6] sm:$0xff]
          %v642 = vld [vmem:[#allocation6 + $0x8] sm:$0xff]
          %v643 = vld [vmem:[#allocation6 + $0x10] sm:$0xff]
          %v644 = vld [vmem:[#allocation6 + $0x18] sm:$0xff]
          %v645 = vld [vmem:[%s2] sm:$0x1]
          %vm646 = vcmask 261120
          %v648 = vsel %vm646, %v640, 0
          %650 = vmatprep.subr.mxu0 0.0
          %651 = vmatpush1.msra.mxu0 0.0
          %652 = vmatprep.subr.mxu0 0.0
          %653 = vmatpush1.msra.mxu0 0.0
          %654 = vmatprep.subr.mxu0 0.0
          %655 = vmatpush1.msra.mxu0 0.0
          %656 = vmatprep.subr.mxu0 0.0
          %657 = vmatpush1.msra.mxu0 0.0
          %658 = vmatprep.subr.mxu0 0.0
          %659 = vmatpush1.msra.mxu0 0.0
          %660 = vmatprep.subr.mxu0 0.0
          %661 = vmatpush1.msra.mxu0 0.0
          %662 = vmatprep.subr.mxu0 0.0
          %663 = vmatpush1.msra.mxu0 0.0
          %664 = vmatprep.subr.mxu0 0.0
          %665 = vmatpush1.msra.mxu0 0.0
          %666 = vmatprep.subr.mxu0 0.0
          %667 = vmatpush1.msra.mxu0 0.0
          %668 = vmatprep.subr.mxu0 0.0
          %669 = vmatpush1.msra.mxu0 0.0
          %670 = vmatprep.subr.mxu0 0.0
          %671 = vmatpush1.msra.mxu0 0.0
          %672 = vmatprep.subr.mxu0 0.0
          %673 = vmatpush1.msra.mxu0 0.0
          %674 = vmatprep.subr.mxu0 0.0
          %675 = vmatpush1.msra.mxu0 %v644
          %676 = vmatprep.subr.mxu0 0.0
          %677 = vmatpush1.msra.mxu0 %v643
          %678 = vmatprep.subr.mxu0 0.0
          %679 = vmatpush1.msra.mxu0 %v642
          %680 = vmatprep.subr.mxu0 0.0
          %681 = vmatpush1.msra.mxu0 %v641
          %682 = vmatprep.subr.mxu0 0.0
          %683 = vmatpush2.msra.mxu0 0.0
          %684 = vmatprep.subr.mxu0 0.0
          %685 = vmatpush2.msra.mxu0 0.0
          %686 = vmatprep.subr.mxu0 0.0
          %687 = vmatpush2.msra.mxu0 0.0
          %688 = vmatprep.subr.mxu0 0.0
          %689 = vmatpush2.msra.mxu0 0.0
          %690 = vmatprep.subr.mxu0 0.0
          %691 = vmatpush2.msra.mxu0 0.0
          %692 = vmatprep.subr.mxu0 0.0
          %693 = vmatpush2.msra.mxu0 0.0
          %694 = vmatprep.subr.mxu0 0.0
          %695 = vmatpush2.msra.mxu0 0.0
          %696 = vmatprep.subr.mxu0 0.0
          %697 = vmatpush2.msra.mxu0 0.0
          %698 = vmatprep.subr.mxu0 0.0
          %699 = vmatpush2.msra.mxu0 0.0
          %700 = vmatprep.subr.mxu0 0.0
          %701 = vmatpush2.msra.mxu0 0.0
          %702 = vmatprep.subr.mxu0 0.0
          %703 = vmatpush2.msra.mxu0 0.0
          %704 = vmatprep.subr.mxu0 0.0
          %705 = vmatpush2.msra.mxu0 0.0
          %706 = vmatprep.subr.mxu0 0.0
          %707 = vmatpush2.msra.mxu0 0.0
          %708 = vmatprep.subr.mxu0 0.0
          %709 = vmatpush2.msra.mxu0 0.0
          %710 = vmatprep.subr.mxu0 0.0
          %711 = vmatpush2.msra.mxu0 0.0
          %712 = vmatprep.subr.mxu0 0.0
          %713 = vmatpush2.msra.mxu0 0.0
          %714 = vmatprep.mubr.f32.mxu0 0.0
          %715 = vmatmul.mubr.f32.gmra.mxu0 %v648
          %v716 = vpop.f32.mrf.mxu0
          %v717 = vadd.f32 %v645, %v716
          %v718 = vpop.f32.mrf.mxu0
          %719 = vdwg.mxu0
          %720 = vst [vmem:[%s217] sm:$0x1] %v717
        $region48: #{tpu_custom_call.1} parent=31 // pred_fallthru
          _
        %s721 = sand.u32 %s111, 1
        %s722 = scalar_lea.sflag [#allocation5], %s721
        %s723 = sand.u32 %s111, 1
        %s724 = scalar_lea.vmem [#allocation8], %s723
        // Predicated region
        $region49: #{tpu_custom_call.1} parent=31 // pred_check
          %p725 = pneg %p121
        $region50: #{tpu_custom_call.1} parent=31 // pred_check_branch
          %727 = sbr.rel (%p725) target = $region52
        $region51: #{tpu_custom_call.1} parent=31 // pred_region
          %s729 = ssub.s32 16, 16
          %730 = vsyncadd %s722, %s729
          %s731 = smul.addr %s25, 16
          %s732 = scalar_lea.hbm %s3, %s731
          %s734 = sshll.u32 %s724, 4
          %s735 = int_to_ptr.vmem [resolvable:$true] %s734
          %737 = dma.vmem_to_hbm [thread:$0]  %s735, 16, %s732, %s722
        $region52: #{tpu_custom_call.1} parent=31 // pred_fallthru
          _
      $region32: #{tpu_custom_call.1} parent=5 // pred_fallthru
        _
      %p738 = scmp.le.s32.totalorder 2, %s16
      // Predicated region
      $region53: #{tpu_custom_call.1} parent=5 // pred_check
        %p739 = pneg %p738
      $region54: #{tpu_custom_call.1} parent=5 // pred_check_branch
        %741 = sbr.rel (%p739) target = $region56
      $region55: #{tpu_custom_call.1} parent=5 // pred_region
        %s742 = ssub.s32 %s16, 2
        // Predicated region
        $region57: #{tpu_custom_call.1} parent=55 // pred_check
          %p743 = pneg %p127
        $region58: #{tpu_custom_call.1} parent=55 // pred_check_branch
          %745 = sbr.rel (%p743) target = $region60
        $region59: #{tpu_custom_call.1} parent=55 // pred_region
          %s746 = sand.u32 %s112, 1
          %s747 = scalar_lea.sflag [#allocation5], %s746
          %s748 = sand.u32 %s112, 1
          %s749 = scalar_lea.vmem [#allocation8], %s748
          %750 = dma.done %s747, 16
        $region60: #{tpu_custom_call.1} parent=55 // pred_fallthru
          _
      $region56: #{tpu_custom_call.1} parent=5 // pred_fallthru
        _
    $region6: #{tpu_custom_call.1} parent=1 // loop_footer
      %s20 = sadd.s32 1, %s16
    $region7: #{tpu_custom_call.1} parent=1 // loop_footer_branch
      %15 = sbr.rel target = $region3
    $region8: #{tpu_custom_call.1} parent=1 // loop_exit
      _
    %751 = vsyncpa [#allocation4], 1
    %s752 = scalar_lea.sflag [#allocation4], 1
    %753 = vsyncpa %s752, 1
    %754 = vsyncpa [#allocation7], 1
    %755 = vsyncpa [#allocation5], 1
    %s756 = scalar_lea.sflag [#allocation5], 1
    %757 = vsyncpa %s756, 1

</llo_original>
